<compile_context>
chip_gen: v5e
topology: v5e:2x2
jax: 0.10.0
libtpu: 0.0.40
codegen_flags: <defaults>
</compile_context>

<pallas_src>
import functools

import jax
import jax.numpy as jnp
from jax.experimental import pallas as pl
from jax.experimental.pallas import tpu as pltpu


# ----------------------------------------------------------------------------
# Per-generation tuning knobs (v5e/v6e: 128 MiB VMEM, v7x: 64 MiB).
# ----------------------------------------------------------------------------
def _vmem_capacity_bytes():
    try:
        info = pltpu.get_tpu_info()
        return int(getattr(info, "vmem_capacity_bytes", 64 << 20))
    except Exception:  # no TPU / API mismatch -> conservative default
        return 64 << 20


_VMEM_CAP = _vmem_capacity_bytes()
_BIG_VMEM = _VMEM_CAP >= (100 << 20)          # True on v5e/v6e, False on v7x
_VMEM_LIMIT = min((_VMEM_CAP * 3) // 4, 96 << 20)
_TM_TARGET = 512 if _BIG_VMEM else 256        # dense row-tile target
_TK_TARGET = 1024 if _BIG_VMEM else 512       # dense contraction-tile target
_TN_TARGET = 512                              # dense output lane-tile target

_COMPILER_PARAMS_CACHE = {}


def _cparams(sem):
    key = tuple(sem)
    if key not in _COMPILER_PARAMS_CACHE:
        _COMPILER_PARAMS_CACHE[key] = pltpu.CompilerParams(
            dimension_semantics=key, vmem_limit_bytes=_VMEM_LIMIT)
    return _COMPILER_PARAMS_CACHE[key]


# ----------------------------------------------------------------------------
# Tile-size helpers (always return a divisor of `dim`, so grids are exact).
# ----------------------------------------------------------------------------
def _pick_tile(dim, target, align):
    """Largest t <= target with t % align == 0 and dim % t == 0, else full dim."""
    if dim <= target:
        return dim
    t = (target // align) * align
    while t >= align:
        if dim % t == 0:
            return t
        t -= align
    return dim


def _pick_lane_tile(dim, target):
    """Lane-dim tile: multiple of 256 preferred (MXU-wide), then 128, else full."""
    if dim <= target:
        return dim
    for align in (256, 128):
        t = (target // align) * align
        while t >= align:
            if dim % t == 0:
                return t
            t -= align
    return dim


def _gelu_tanh(y):
    # TODO(synk): tanh-approx GELU; HF 'gelu' default is the erf form.
    return 0.5 * y * (1.0 + jnp.tanh(
        0.7978845608028654 * (y + 0.044715 * y * y * y)))


# ----------------------------------------------------------------------------
# Tiled dense: x @ w + b (+ activation)
# ----------------------------------------------------------------------------
def _matmul_kernel(x_ref, w_ref, b_ref, o_ref, acc_ref, *, activation):
    @pl.when(pl.program_id(2) == 0)
    def _():
        acc_ref[...] = jnp.zeros_like(acc_ref)

    acc_ref[...] += jnp.dot(x_ref[...], w_ref[...],
                            preferred_element_type=jnp.float32)

    @pl.when(pl.program_id(2) == pl.num_programs(2) - 1)
    def _():
        y = acc_ref[...] + b_ref[...].astype(jnp.float32)
        if activation == "gelu":
            y = _gelu_tanh(y)
        elif activation == "tanh":
            y = jnp.tanh(y)
        o_ref[...] = y.astype(o_ref.dtype)


def dense(x, w, b, activation="none", out_dtype=jnp.bfloat16):
    """x:[M,K] @ w:[K,N] + b:[N] (+ activation), tiled + pipelined."""
    M, K = x.shape
    N = w.shape[1]
    tm = _pick_tile(M, _TM_TARGET, 8)
    tn = _pick_lane_tile(N, _TN_TARGET)
    tk = _pick_lane_tile(K, _TK_TARGET)
    kern = functools.partial(_matmul_kernel, activation=activation)
    return pl.pallas_call(
        kern,
        out_shape=jax.ShapeDtypeStruct((M, N), out_dtype),
        grid=(M // tm, N // tn, K // tk),
        in_specs=[
            pl.BlockSpec((tm, tk), lambda i, j, k: (i, k)),
            pl.BlockSpec((tk, tn), lambda i, j, k: (k, j)),
            pl.BlockSpec((1, tn), lambda i, j, k: (0, j)),
        ],
        out_specs=pl.BlockSpec((tm, tn), lambda i, j, k: (i, j)),
        scratch_shapes=[pltpu.VMEM((tm, tn), jnp.float32)],
        compiler_params=_cparams(("parallel", "parallel", "arbitrary")),
    )(x, w, b.reshape(1, N))


# ----------------------------------------------------------------------------
# Tiled dense + bias + residual + LayerNorm (N kept whole for LN stats)
# ----------------------------------------------------------------------------
def _matmul_res_ln_kernel(x_ref, w_ref, b_ref, r_ref, g_ref, be_ref,
                          o_ref, acc_ref, *, eps):
    @pl.when(pl.program_id(1) == 0)
    def _():
        acc_ref[...] = jnp.zeros_like(acc_ref)

    acc_ref[...] += jnp.dot(x_ref[...], w_ref[...],
                            preferred_element_type=jnp.float32)

    @pl.when(pl.program_id(1) == pl.num_programs(1) - 1)
    def _():
        y = (acc_ref[...] + b_ref[...].astype(jnp.float32)
             + r_ref[...].astype(jnp.float32))
        mean = jnp.mean(y, axis=-1, keepdims=True)
        var = jnp.mean((y - mean) ** 2, axis=-1, keepdims=True)
        inv = jax.lax.rsqrt(var + eps)
        out = ((y - mean) * inv * g_ref[...].astype(jnp.float32)
               + be_ref[...].astype(jnp.float32))
        o_ref[...] = out.astype(o_ref.dtype)


def dense_residual_ln(x, w, b, residual, gamma, beta, eps):
    """LayerNorm(x@w + b + residual)."""
    M, K = x.shape
    N = w.shape[1]
    tm = _pick_tile(M, _TM_TARGET, 8)
    tk = _pick_lane_tile(K, _TK_TARGET)
    kern = functools.partial(_matmul_res_ln_kernel, eps=eps)
    return pl.pallas_call(
        kern,
        out_shape=jax.ShapeDtypeStruct((M, N), jnp.bfloat16),
        grid=(M // tm, K // tk),
        in_specs=[
            pl.BlockSpec((tm, tk), lambda i, k: (i, k)),
            pl.BlockSpec((tk, N), lambda i, k: (k, 0)),
            pl.BlockSpec((1, N), lambda i, k: (0, 0)),
            pl.BlockSpec((tm, N), lambda i, k: (i, 0)),
            pl.BlockSpec((1, N), lambda i, k: (0, 0)),
            pl.BlockSpec((1, N), lambda i, k: (0, 0)),
        ],
        out_specs=pl.BlockSpec((tm, N), lambda i, k: (i, 0)),
        scratch_shapes=[pltpu.VMEM((tm, N), jnp.float32)],
        compiler_params=_cparams(("parallel", "arbitrary")),
    )(x, w, b.reshape(1, N), residual, gamma.reshape(1, N), beta.reshape(1, N))


# ----------------------------------------------------------------------------
# Fused FFN: GELU(x@wi + bi) @ wo2 + bo2 + residual -> LayerNorm
# The [M, I] GELU intermediate lives only in VMEM (never written to HBM).
# ----------------------------------------------------------------------------
def _ffn_res_ln_kernel(x_ref, wi_ref, bi_ref, wo2_ref, bo2_ref, r_ref,
                       g_ref, be_ref, o_ref, acc_ref, *, eps):
    @pl.when(pl.program_id(1) == 0)
    def _():
        acc_ref[...] = jnp.zeros_like(acc_ref)

    u = jnp.dot(x_ref[...], wi_ref[...], preferred_element_type=jnp.float32)
    u = _gelu_tanh(u + bi_ref[...].astype(jnp.float32))
    acc_ref[...] += jnp.dot(u.astype(jnp.bfloat16), wo2_ref[...],
                            preferred_element_type=jnp.float32)

    @pl.when(pl.program_id(1) == pl.num_programs(1) - 1)
    def _():
        y = (acc_ref[...] + bo2_ref[...].astype(jnp.float32)
             + r_ref[...].astype(jnp.float32))
        mean = jnp.mean(y, axis=-1, keepdims=True)
        var = jnp.mean((y - mean) ** 2, axis=-1, keepdims=True)
        inv = jax.lax.rsqrt(var + eps)
        out = ((y - mean) * inv * g_ref[...].astype(jnp.float32)
               + be_ref[...].astype(jnp.float32))
        o_ref[...] = out.astype(o_ref.dtype)


def ffn_residual_ln(x, wi, bi, wo2, bo2, residual, gamma, beta, eps):
    """LayerNorm(GELU(x@wi + bi) @ wo2 + bo2 + residual), I as reduction axis."""
    M, H = x.shape
    I = wi.shape[1]
    tm = _pick_tile(M, _TM_TARGET, 8)
    ti = _pick_lane_tile(I, _TK_TARGET)
    kern = functools.partial(_ffn_res_ln_kernel, eps=eps)
    return pl.pallas_call(
        kern,
        out_shape=jax.ShapeDtypeStruct((M, H), jnp.bfloat16),
        grid=(M // tm, I // ti),
        in_specs=[
            pl.BlockSpec((tm, H), lambda i, k: (i, 0)),    # x (full H rows)
            pl.BlockSpec((H, ti), lambda i, k: (0, k)),    # wi chunk
            pl.BlockSpec((1, ti), lambda i, k: (0, k)),    # bi chunk
            pl.BlockSpec((ti, H), lambda i, k: (k, 0)),    # wo2 chunk
            pl.BlockSpec((1, H), lambda i, k: (0, 0)),     # bo2
            pl.BlockSpec((tm, H), lambda i, k: (i, 0)),    # residual
            pl.BlockSpec((1, H), lambda i, k: (0, 0)),     # ln gamma
            pl.BlockSpec((1, H), lambda i, k: (0, 0)),     # ln beta
        ],
        out_specs=pl.BlockSpec((tm, H), lambda i, k: (i, 0)),
        scratch_shapes=[pltpu.VMEM((tm, H), jnp.float32)],
        compiler_params=_cparams(("parallel", "arbitrary")),
    )(x, wi, bi.reshape(1, I), wo2, bo2.reshape(1, H), residual,
      gamma.reshape(1, H), beta.reshape(1, H))


# ----------------------------------------------------------------------------
# Standalone row-tiled LayerNorm (embedding LN only)
# ----------------------------------------------------------------------------
def _layernorm_kernel(x_ref, g_ref, b_ref, o_ref, *, eps):
    x = x_ref[...].astype(jnp.float32)
    mean = jnp.mean(x, axis=-1, keepdims=True)
    var = jnp.mean((x - mean) ** 2, axis=-1, keepdims=True)
    inv = jax.lax.rsqrt(var + eps)
    y = ((x - mean) * inv * g_ref[...].astype(jnp.float32)
         + b_ref[...].astype(jnp.float32))
    o_ref[...] = y.astype(o_ref.dtype)


def layernorm(x, gamma, beta, eps):
    M, H = x.shape
    tm = _pick_tile(M, 512, 8)
    kern = functools.partial(_layernorm_kernel, eps=eps)
    return pl.pallas_call(
        kern,
        out_shape=jax.ShapeDtypeStruct((M, H), jnp.bfloat16),
        grid=(M // tm,),
        in_specs=[
            pl.BlockSpec((tm, H), lambda i: (i, 0)),
            pl.BlockSpec((1, H), lambda i: (0, 0)),
            pl.BlockSpec((1, H), lambda i: (0, 0)),
        ],
        out_specs=pl.BlockSpec((tm, H), lambda i: (i, 0)),
        compiler_params=_cparams(("parallel",)),
    )(x, gamma.reshape(1, H), beta.reshape(1, H))


# ----------------------------------------------------------------------------
# Flash attention reading per-head Q/K/V directly from the fused [B*S, 3H] QKV
# buffer and writing the context straight into a [B*S, H] layout.
# The 1/sqrt(dH) scale is already folded into the Q projection weights.
# ----------------------------------------------------------------------------
def _flash_attn_kernel(q_ref, k_ref, v_ref, bias_ref, o_ref,
                       m_sc, l_sc, acc_sc):
    ki = pl.program_id(2)

    @pl.when(ki == 0)
    def _():
        m_sc[...] = jnp.full_like(m_sc, -jnp.inf)
        l_sc[...] = jnp.zeros_like(l_sc)
        acc_sc[...] = jnp.zeros_like(acc_sc)

    q = q_ref[...]                       # [tq, dH]  bf16 (pre-scaled)
    k = k_ref[...]                       # [tkv, dH] bf16
    v = v_ref[...]                       # [tkv, dH] bf16
    bias = bias_ref[0]                   # [1, tkv]  f32 additive mask

    s = jax.lax.dot_general(q, k, (((1,), (1,)), ((), ())),
                            preferred_element_type=jnp.float32)
    s = s + bias                         # [tq, tkv]

    m_new = jnp.maximum(m_sc[...], jnp.max(s, axis=-1, keepdims=True))
    alpha = jnp.exp(m_sc[...] - m_new)
    # bf16 exp: p is consumed in bf16 by the PV matmul; l/acc stay f32.
    p = jnp.exp((s - m_new).astype(jnp.bfloat16))
    l_sc[...] = alpha * l_sc[...] + jnp.sum(p.astype(jnp.float32),
                                            axis=-1, keepdims=True)
    acc_sc[...] = alpha * acc_sc[...] + jnp.dot(
        p, v, preferred_element_type=jnp.float32)
    m_sc[...] = m_new

    @pl.when(ki == pl.num_programs(2) - 1)
    def _():
        inv_l = pl.reciprocal(l_sc[...], approx=True)
        o_ref[...] = (acc_sc[...] * inv_l).astype(o_ref.dtype)


def flash_attention_fused_qkv(qkv, att_bias, B, S, n_heads, head_dim):
    """qkv: [B*S, 3H] (Q|K|V, heads interleaved inside each H chunk).
    att_bias: [B, 1, S] additive mask. Returns context as [B*S, H]."""
    H = n_heads * head_dim
    # Lane density: head_dim must be a multiple of 128 for aligned per-head
    # column blocks.  TODO(synk): for dH=64 pack 2 heads per flash program.
    assert head_dim % 128 == 0, "demo config keeps dH lane-aligned (128)"
    tq = _pick_tile(S, 512, 8)           # bigger q tiles cut K/V re-streaming
    tkv = _pick_lane_tile(S, 512)
    nqb = S // tq
    nkb = S // tkv

    def q_map(bh, qi, ki):
        return ((bh // n_heads) * nqb + qi, bh % n_heads)

    def k_map(bh, qi, ki):
        return ((bh // n_heads) * nkb + ki, n_heads + bh % n_heads)

    def v_map(bh, qi, ki):
        return ((bh // n_heads) * nkb + ki, 2 * n_heads + bh % n_heads)

    def bias_map(bh, qi, ki):
        return (bh // n_heads, 0, ki)

    def out_map(bh, qi, ki):
        return ((bh // n_heads) * nqb + qi, bh % n_heads)

    return pl.pallas_call(
        _flash_attn_kernel,
        out_shape=jax.ShapeDtypeStruct((B * S, H), jnp.bfloat16),
        grid=(B * n_heads, nqb, nkb),
        in_specs=[
            pl.BlockSpec((tq, head_dim), q_map),
            pl.BlockSpec((tkv, head_dim), k_map),
            pl.BlockSpec((tkv, head_dim), v_map),
            pl.BlockSpec((1, 1, tkv), bias_map),
        ],
        out_specs=pl.BlockSpec((tq, head_dim), out_map),
        scratch_shapes=[
            pltpu.VMEM((tq, 1), jnp.float32),          # running max
            pltpu.VMEM((tq, 1), jnp.float32),          # running denom
            pltpu.VMEM((tq, head_dim), jnp.float32),   # output accumulator
        ],
        # Note (v7x megacore): leading parallel axis has B*nH >= 2 blocks.
        compiler_params=_cparams(("parallel", "parallel", "arbitrary")),
    )(qkv, qkv, qkv, att_bias)


# ----------------------------------------------------------------------------
# Small BERT-like `main_model` with deterministic synthetic weights (bf16)
# ----------------------------------------------------------------------------
class Config:
    vocab_size = 64
    hidden_size = 256
    num_heads = 2
    head_dim = 128          # hidden_size // num_heads (lane-aligned)
    intermediate_size = 1024
    num_layers = 2
    max_position = 16
    type_vocab_size = 2
    layer_norm_eps = 1e-12
    hidden_dropout_prob = 0.1   # identity at inference time


def init_params(cfg, key):
    p = {}
    ks = iter(jax.random.split(key, 256))

    def nrm32(shape):
        return 0.02 * jax.random.normal(next(ks), shape)   # f32

    def nrm(shape):
        return nrm32(shape).astype(jnp.bfloat16)

    def ones(shape):
        return jnp.ones(shape, jnp.bfloat16)

    def zeros(shape):
        return jnp.zeros(shape, jnp.bfloat16)

    H, I = cfg.hidden_size, cfg.intermediate_size
    att_scale = 1.0 / (cfg.head_dim ** 0.5)

    p["word_emb"] = nrm((cfg.vocab_size, H))
    p["pos_emb"] = nrm((cfg.max_position, H))
    p["type_emb"] = nrm((cfg.type_vocab_size, H))
    p["emb_ln_g"] = ones((H,))
    p["emb_ln_b"] = zeros((H,))

    p["layers"] = []
    for _ in range(cfg.num_layers):
        # Fused Q|K|V projection.  The attention 1/sqrt(dH) scale is folded
        # into the Q columns here (softmax((xWq/√d) (xWk)ᵀ) is exact), so the
        # flash kernel never multiplies the scores by `scale`.
        wqkv = nrm32((H, 3 * H))
        wqkv = wqkv.at[:, :H].multiply(att_scale)
        bqkv = jnp.zeros((3 * H,), jnp.float32).at[:H].multiply(att_scale)
        layer = {
            "wqkv": wqkv.astype(jnp.bfloat16), "bqkv": bqkv.astype(jnp.bfloat16),
            "wo": nrm((H, H)), "bo": zeros((H,)),
            "ln1_g": ones((H,)), "ln1_b": zeros((H,)),
            "wi": nrm((H, I)), "bi": zeros((I,)),
            "wo2": nrm((I, H)), "bo2": zeros((H,)),
            "ln2_g": ones((H,)), "ln2_b": zeros((H,)),
        }
        p["layers"].append(layer)

    p["pool_w"] = nrm((H, H))
    p["pool_b"] = zeros((H,))
    return p


def big_model_forward(params, cfg, tok, att):
    """Equivalent of BigModel.forward(tok, att): BERT pooler_output + dropout.

    tok: [B, S] int32, att: [B, S] float (1 = attend, 0 = masked).
    """
    B, S = tok.shape
    H, nH, dH = cfg.hidden_size, cfg.num_heads, cfg.head_dim
    assert S <= cfg.max_position, "sequence longer than position table"

    # --- embeddings (glue: gathers); token_type_ids are all zeros as in BigModel
    h = (jnp.take(params["word_emb"], tok, axis=0)
         + params["pos_emb"][None, :S, :]
         + params["type_emb"][0][None, None, :]).astype(jnp.bfloat16)
    h2d = layernorm(h.reshape(B * S, H), params["emb_ln_g"],
                    params["emb_ln_b"], cfg.layer_norm_eps)        # [B*S, H] bf16

    # Additive attention bias precomputed once per forward: [B, 1, S] f32.
    att_bias = ((1.0 - att.astype(jnp.float32)) * (-1e9)).reshape(B, 1, S)

    for lyr in params["layers"]:
        # --- fused QKV projection (scale already folded into Q columns)
        qkv = dense(h2d, lyr["wqkv"], lyr["bqkv"])                 # [B*S, 3H]

        # --- flash attention: per-head Q/K/V sliced by BlockSpec index_maps,
        #     context written directly in [B*S, H] layout (no XLA transposes).
        ctx2d = flash_attention_fused_qkv(qkv, att_bias, B, S, nH, dH)

        # --- attn output projection + residual + LN1 (fused)
        h2d = dense_residual_ln(ctx2d, lyr["wo"], lyr["bo"], h2d,
                                lyr["ln1_g"], lyr["ln1_b"], cfg.layer_norm_eps)

        # --- FFN: up-proj + GELU + down-proj + residual + LN2, all in one
        #     kernel (the [B*S, I] intermediate never hits HBM).
        h2d = ffn_residual_ln(h2d, lyr["wi"], lyr["bi"], lyr["wo2"], lyr["bo2"],
                              h2d, lyr["ln2_g"], lyr["ln2_b"],
                              cfg.layer_norm_eps)

    # --- pooler: tanh(W * hidden[:, 0] + b)  (f32 output for user-facing logits)
    cls = h2d.reshape(B, S, H)[:, 0, :]
    pooled = dense(cls, params["pool_w"], params["pool_b"],
                   activation="tanh", out_dtype=jnp.float32)

    # --- nn.Dropout(hidden_dropout_prob): identity in eval/inference mode.
    logits = pooled
    return logits


if __name__ == "__main__":
    cfg = Config()
    key = jax.random.PRNGKey(0)
    k_param, k_tok = jax.random.split(key)

    params = init_params(cfg, k_param)

    B, S = 2, 8
    tok = jax.random.randint(k_tok, (B, S), 0, cfg.vocab_size, dtype=jnp.int32)
    att = jnp.ones((B, S), jnp.float32).at[1, 6:].set(0.0)  # mask tail of 2nd seq

    logits = big_model_forward(params, cfg, tok, att)
    jax.block_until_ready(logits)

    assert logits.shape == (B, cfg.hidden_size)
    assert bool(jnp.all(jnp.isfinite(logits)))
    print("KERNEL_OK")
</pallas_src>

<mosaic_0001>
module attributes {stable_mosaic.version = 11 : i64} {
  func.func @_layernorm_kernel(%arg0: i32, %arg1: memref<16x256xbf16, #tpu.memory_space<vmem>>, %arg2: memref<1x256xbf16, #tpu.memory_space<vmem>>, %arg3: memref<1x256xbf16, #tpu.memory_space<vmem>>, %arg4: memref<16x256xbf16, #tpu.memory_space<vmem>>) attributes {dimension_semantics = [#tpu.dimension_semantics<parallel>], iteration_bounds = array<i64: 1>, scalar_prefetch = 0 : i64, scratch_operands = 0 : i64, tpu.core_type = #tpu.core_type<tc>, window_params = [{transform_indices = @transform_0, window_bounds = array<i64: 16, 256>}, {pipeline_mode = #tpu.pipeline_mode<synchronous>, transform_indices = @transform_1, window_bounds = array<i64: 1, 256>}, {pipeline_mode = #tpu.pipeline_mode<synchronous>, transform_indices = @transform_2, window_bounds = array<i64: 1, 256>}, {transform_indices = @transform_3, window_bounds = array<i64: 16, 256>}]} {
    %c0 = arith.constant 0 : index
    %c0_0 = arith.constant 0 : index
    %0 = vector.load %arg1[%c0, %c0_0] : memref<16x256xbf16, #tpu.memory_space<vmem>>, vector<16x256xbf16>
    %1 = arith.extf %0 : vector<16x256xbf16> to vector<16x256xf32>
    %cst = arith.constant dense<0.000000e+00> : vector<16xf32>
    %2 = vector.multi_reduction <add>, %1, %cst [1] : vector<16x256xf32> to vector<16xf32>
    %3 = vector.shape_cast %2 : vector<16xf32> to vector<16x1xf32>
    %cst_1 = arith.constant 2.560000e+02 : f32
    %4 = vector.broadcast %cst_1 : f32 to vector<16x1xf32>
    %5 = arith.divf %3, %4 : vector<16x1xf32>
    %6 = vector.broadcast %5 : vector<16x1xf32> to vector<16x256xf32>
    %7 = arith.subf %1, %6 : vector<16x256xf32>
    %8 = arith.mulf %7, %7 : vector<16x256xf32>
    %cst_2 = arith.constant dense<0.000000e+00> : vector<16xf32>
    %9 = vector.multi_reduction <add>, %8, %cst_2 [1] : vector<16x256xf32> to vector<16xf32>
    %10 = vector.shape_cast %9 : vector<16xf32> to vector<16x1xf32>
    %cst_3 = arith.constant 2.560000e+02 : f32
    %11 = vector.broadcast %cst_3 : f32 to vector<16x1xf32>
    %12 = arith.divf %10, %11 : vector<16x1xf32>
    %cst_4 = arith.constant 9.99999996E-13 : f32
    %13 = vector.broadcast %cst_4 : f32 to vector<16x1xf32>
    %14 = arith.addf %12, %13 : vector<16x1xf32>
    %15 = math.rsqrt %14 : vector<16x1xf32>
    %16 = vector.broadcast %5 : vector<16x1xf32> to vector<16x256xf32>
    %17 = arith.subf %1, %16 : vector<16x256xf32>
    %18 = vector.broadcast %15 : vector<16x1xf32> to vector<16x256xf32>
    %19 = arith.mulf %17, %18 : vector<16x256xf32>
    %c0_5 = arith.constant 0 : index
    %c0_6 = arith.constant 0 : index
    %20 = vector.load %arg2[%c0_5, %c0_6] : memref<1x256xbf16, #tpu.memory_space<vmem>>, vector<1x256xbf16>
    %21 = arith.extf %20 : vector<1x256xbf16> to vector<1x256xf32>
    %22 = vector.broadcast %21 : vector<1x256xf32> to vector<16x256xf32>
    %23 = arith.mulf %19, %22 : vector<16x256xf32>
    %c0_7 = arith.constant 0 : index
    %c0_8 = arith.constant 0 : index
    %24 = vector.load %arg3[%c0_7, %c0_8] : memref<1x256xbf16, #tpu.memory_space<vmem>>, vector<1x256xbf16>
    %25 = arith.extf %24 : vector<1x256xbf16> to vector<1x256xf32>
    %26 = vector.broadcast %25 : vector<1x256xf32> to vector<16x256xf32>
    %27 = arith.addf %23, %26 : vector<16x256xf32>
    %28 = arith.truncf %27 : vector<16x256xf32> to vector<16x256xbf16>
    %c0_9 = arith.constant 0 : index
    %c0_10 = arith.constant 0 : index
    %29 = vector.load %arg4[%c0_9, %c0_10] : memref<16x256xbf16, #tpu.memory_space<vmem>>, vector<16x256xbf16>
    tpu.vector_store %arg4[%c0_9, %c0_10], %28 {strides = array<i32>} : memref<16x256xbf16, #tpu.memory_space<vmem>>, vector<16x256xbf16>,
    return
  }
  func.func @transform_0(%arg0: i32) -> (i32, i32) {
    %c0_i32 = arith.constant 0 : i32
    %c0_i32_0 = arith.constant 0 : i32
    return %arg0, %c0_i32 : i32, i32
  }
  func.func @transform_1(%arg0: i32) -> (i32, i32) {
    %c0_i32 = arith.constant 0 : i32
    %c0_i32_0 = arith.constant 0 : i32
    %c0_i32_1 = arith.constant 0 : i32
    return %c0_i32, %c0_i32_0 : i32, i32
  }
  func.func @transform_2(%arg0: i32) -> (i32, i32) {
    %c0_i32 = arith.constant 0 : i32
    %c0_i32_0 = arith.constant 0 : i32
    %c0_i32_1 = arith.constant 0 : i32
    return %c0_i32, %c0_i32_0 : i32, i32
  }
  func.func @transform_3(%arg0: i32) -> (i32, i32) {
    %c0_i32 = arith.constant 0 : i32
    %c0_i32_0 = arith.constant 0 : i32
    return %arg0, %c0_i32 : i32, i32
  }
}

</mosaic_0001>

<llo_original>
// kernel: tpu_custom_call.1
$region0: #{tpu_custom_call.1}
  #allocation0 [shape = 'u32[]', space=smem, size = 0x4, offset = 0x4, fixed_abs, tag = 'smem constant byte address 0x4 - core index']
  #allocation1 [shape = 'u32[72,128]{1,0:T(1,128)}', space=vmem, size = 0x9000, scoped, tag = 'internal scratch']
  %s0 = inlined_call_operand.hbm [shape: bf16[16,256], index: 0, kind: input, shape index: {}]
  %s1 = inlined_call_operand.hbm [shape: bf16[1,256], index: 1, kind: input, shape index: {}]
  %s2 = inlined_call_operand.hbm [shape: bf16[1,256], index: 2, kind: input, shape index: {}]
  %s3 = inlined_call_operand.hbm [shape: bf16[16,256], index: 3, kind: output, shape index: {}]
  %s4 = sld [smem:[#allocation0]]
  $region34: #{tpu_custom_call.1} parent=0
    _
  %s6 = ssub.s32 1, %s4
  %s7 = scalar_select 0, %s6, %s4
  $region1: #{tpu_custom_call.1} parent=0
    #allocation2 [shape = 'u8[8192]{0}', space=vmem, size = 0x2000, scoped, tag = 'input window, operand 0, single buffered']
    #allocation3 [shape = 's32[1]{0}', space=sflag, size = 0x4, scoped, tag = 'scoped memory for tpu_custom_call.1']
    #allocation4 [shape = 's32[1]{0}', space=sflag, size = 0x4, scoped, tag = 'scoped memory for tpu_custom_call.1']
    #allocation5 [shape = 'u8[1024]{0}', space=vmem, size = 0x400, scoped, tag = 'input window, operand 1, single buffered']
    #allocation6 [shape = 's32[1]{0}', space=sflag, size = 0x4, scoped, tag = 'scoped memory for tpu_custom_call.1']
    #allocation7 [shape = 'u8[1024]{0}', space=vmem, size = 0x400, scoped, tag = 'input window, operand 2, single buffered']
    #allocation8 [shape = 'u8[8192]{0}', space=vmem, size = 0x2000, scoped, tag = 'output window, operand 0, single buffered']
    %8 = vsyncpa [#allocation3], 0
    %9 = vsyncpa [#allocation6], 0
    %10 = vsyncpa [#allocation4], 0
    // Predicated region
    $region2: #{tpu_custom_call.1} parent=1 // pred_check
      _
    $region3: #{tpu_custom_call.1} parent=1 // pred_check_branch
      %12 = sbr.rel (0) target = $region5
    $region4: #{tpu_custom_call.1} parent=1 // pred_region
      %14 = vsyncadd [#allocation3], 0
      %s15 = sshll.u32 %s0, 4
      %s16 = int_to_ptr.hbm [resolvable:$true] %s15
      %s17 = sshll.u32 [#allocation2], 4
      %s18 = int_to_ptr.vmem [resolvable:$true] %s17
      %23 = dma.hbm_to_vmem [thread:$0]  %s16, 256, %s18, [#allocation3], 128, 128, 8
    $region5: #{tpu_custom_call.1} parent=1 // pred_fallthru
      _
    // Predicated region
    $region6: #{tpu_custom_call.1} parent=1 // pred_check
      _
    $region7: #{tpu_custom_call.1} parent=1 // pred_check_branch
      %25 = sbr.rel (0) target = $region9
    $region8: #{tpu_custom_call.1} parent=1 // pred_region
      %27 = vsyncadd [#allocation6], 0
      %s29 = sshll.u32 %s1, 4
      %s30 = int_to_ptr.hbm [resolvable:$true] %s29
      %s31 = sshll.u32 [#allocation5], 4
      %s32 = int_to_ptr.vmem [resolvable:$true] %s31
      %34 = dma.hbm_to_vmem [thread:$0]  %s30, 32, %s32, [#allocation6]
    $region9: #{tpu_custom_call.1} parent=1 // pred_fallthru
      _
    // Predicated region
    $region10: #{tpu_custom_call.1} parent=1 // pred_check
      _
    $region11: #{tpu_custom_call.1} parent=1 // pred_check_branch
      %36 = sbr.rel (0) target = $region13
    $region12: #{tpu_custom_call.1} parent=1 // pred_region
      %38 = vsyncadd [#allocation6], 0
      %s40 = sshll.u32 %s2, 4
      %s41 = int_to_ptr.hbm [resolvable:$true] %s40
      %s42 = sshll.u32 [#allocation7], 4
      %s43 = int_to_ptr.vmem [resolvable:$true] %s42
      %45 = dma.hbm_to_vmem [thread:$0]  %s41, 32, %s43, [#allocation6]
    $region13: #{tpu_custom_call.1} parent=1 // pred_fallthru
      _
    // Predicated region
    $region14: #{tpu_custom_call.1} parent=1 // pred_check
      _
    $region15: #{tpu_custom_call.1} parent=1 // pred_check_branch
      %47 = sbr.rel (0) target = $region17
    $region16: #{tpu_custom_call.1} parent=1 // pred_region
      %49 = dma.done [#allocation3], 256
    $region17: #{tpu_custom_call.1} parent=1 // pred_fallthru
      _
    // Predicated region
    $region18: #{tpu_custom_call.1} parent=1 // pred_check
      _
    $region19: #{tpu_custom_call.1} parent=1 // pred_check_branch
      %51 = sbr.rel (0) target = $region21
    $region20: #{tpu_custom_call.1} parent=1 // pred_region
      %53 = dma.done [#allocation6], 32
    $region21: #{tpu_custom_call.1} parent=1 // pred_fallthru
      _
    // Predicated region
    $region22: #{tpu_custom_call.1} parent=1 // pred_check
      _
    $region23: #{tpu_custom_call.1} parent=1 // pred_check_branch
      %55 = sbr.rel (0) target = $region25
    $region24: #{tpu_custom_call.1} parent=1 // pred_region
      %57 = dma.done [#allocation6], 32
    $region25: #{tpu_custom_call.1} parent=1 // pred_fallthru
      _
    %v58 = vld [vmem:[#allocation2] sm:$0xff]
    %v59 = vld [vmem:[#allocation2 + $0x8] sm:$0xff]
    %v60 = vunpack.c.l.bf16 %v58
    %v61 = vunpack.c.h.bf16 %v58
    %v62 = vunpack.c.l.bf16 %v59
    %v63 = vunpack.c.h.bf16 %v59
    %v64 = vadd.f32 %v60, %v61
    %65 = vadd.xlane.f32.xlu0 %v64
    %v66 = vpop.xlane.xlu0 %65
    %v67 = vadd.f32 %v62, %v63
    %68 = vadd.xlane.f32.xlu0 %v67
    %v69 = vpop.xlane.xlu0 %68
    %v70 = vrcp.pop 256.0
    %v71 = vmul.f32 256.0, %v70
    %v72 = vsub.f32 1.0, %v71
    %v73 = vmul.f32 %v70, %v72
    %v74 = vadd.f32 %v70, %v73
    %vm75 = vweird.f32 %v70
    %v76 = vsel %vm75, %v70, %v74
    %v77 = vmul.f32 %v66, %v76
    %v78 = vmul.f32 %v69, %v76
    %v79 = vsub.f32 %v60, %v77
    %v80 = vsub.f32 %v61, %v77
    %v81 = vsub.f32 %v62, %v78
    %v82 = vsub.f32 %v63, %v78
    %v83 = vmul.f32 %v79, %v79
    %v84 = vmul.f32 %v80, %v80
    %v85 = vmul.f32 %v81, %v81
    %v86 = vmul.f32 %v82, %v82
    %v87 = vadd.f32 %v83, %v84
    %88 = vadd.xlane.f32.xlu0 %v87
    %v89 = vpop.xlane.xlu0 %88
    %v90 = vadd.f32 %v85, %v86
    %91 = vadd.xlane.f32.xlu0 %v90
    %v92 = vpop.xlane.xlu0 %91
    %v93 = vmul.f32 %v89, %v76
    %v94 = vmul.f32 %v92, %v76
    %v95 = vadd.f32 %v93, 1e-12
    %v96 = vadd.f32 %v94, 1e-12
    %v97 = vrsqrt.pop %v95
    %v98 = vmul.f32 %v97, %v95
    %v99 = vmul.f32 %v98, %v97
    %v100 = vmul.f32 0.5, %v99
    %v101 = vsub.f32 1.5, %v100
    %v102 = vmul.f32 %v97, %v101
    %vm103 = vweird.f32 %v95
    %vm104 = vweird.f32 %v97
    %vm105 = vmor %vm103, %vm104
    %v106 = vsel %vm105, %v97, %v102
    %v107 = vrsqrt.pop %v96
    %v108 = vmul.f32 %v107, %v96
    %v109 = vmul.f32 %v108, %v107
    %v110 = vmul.f32 0.5, %v109
    %v111 = vsub.f32 1.5, %v110
    %v112 = vmul.f32 %v107, %v111
    %vm113 = vweird.f32 %v96
    %vm114 = vweird.f32 %v107
    %vm115 = vmor %vm113, %vm114
    %v116 = vsel %vm115, %v107, %v112
    %v117 = vmul.f32 %v79, %v106
    %v118 = vmul.f32 %v80, %v106
    %v119 = vmul.f32 %v81, %v116
    %v120 = vmul.f32 %v82, %v116
    %v121 = vld [vmem:[#allocation5] sm:$0x3]
    %v122 = vunpack.c.l.bf16 %v121
    %v124 = vperm.slane %v122, 0
    %v125 = vperm.slane %v122, 2
    %v128 = vperm.slane %v124, 0
    %v129 = vperm.slane %v125, 0
    %v130 = vmul.f32 %v117, %v128
    %v131 = vmul.f32 %v118, %v129
    %v132 = vmul.f32 %v119, %v128
    %v133 = vmul.f32 %v120, %v129
    %v134 = vld [vmem:[#allocation7] sm:$0x3]
    %v135 = vunpack.c.l.bf16 %v134
    %v137 = vperm.slane %v135, 0
    %v138 = vperm.slane %v135, 2
    %v141 = vperm.slane %v137, 0
    %v142 = vperm.slane %v138, 0
    %v143 = vadd.f32 %v130, %v141
    %v144 = vadd.f32 %v131, %v142
    %v145 = vadd.f32 %v132, %v141
    %v146 = vadd.f32 %v133, %v142
    %v147 = vpack.c.bf16 %v144, %v143
    %v148 = vpack.c.bf16 %v146, %v145
    %149 = vst [vmem:[#allocation8] sm:$0xff] %v147
    %150 = vst [vmem:[#allocation8 + $0x8] sm:$0xff] %v148
    // Predicated region
    $region26: #{tpu_custom_call.1} parent=1 // pred_check
      _
    $region27: #{tpu_custom_call.1} parent=1 // pred_check_branch
      %152 = sbr.rel (0) target = $region29
    $region28: #{tpu_custom_call.1} parent=1 // pred_region
      %154 = vsyncadd [#allocation4], 0
      %s155 = sshll.u32 [#allocation8], 4
      %s156 = int_to_ptr.vmem [resolvable:$true] %s155
      %s157 = sshll.u32 %s3, 4
      %s158 = int_to_ptr.hbm [resolvable:$true] %s157
      %163 = dma.vmem_to_hbm [thread:$0]  %s156, 256, %s158, [#allocation4], 128, 128, 8
    $region29: #{tpu_custom_call.1} parent=1 // pred_fallthru
      _
    // Predicated region
    $region30: #{tpu_custom_call.1} parent=1 // pred_check
      _
    $region31: #{tpu_custom_call.1} parent=1 // pred_check_branch
      %165 = sbr.rel (0) target = $region33
    $region32: #{tpu_custom_call.1} parent=1 // pred_region
      %167 = dma.done [#allocation4], 256
    $region33: #{tpu_custom_call.1} parent=1 // pred_fallthru
      _
    %168 = vsyncpa [#allocation3], 1
    %169 = vsyncpa [#allocation6], 1
    %170 = vsyncpa [#allocation4], 1

</llo_original>
